<compile_context>
chip_gen: v7x
topology: tpu7x:2x2x1
jax: 0.10.0
libtpu: 0.0.40
codegen_flags: <defaults>
</compile_context>

<pallas_src>
import jax
import jax.numpy as jnp
from jax.experimental import pallas as pl
from jax.experimental.pallas import tpu as pltpu

F_DIM = 512
DIM_ORIG = 201   # 'else' branch of the dim_orig chain (dataset='MNIST' default)
K_PAD = 256      # contraction dim padded to MXU-friendly multiple of 128


def mlp_kernel(x_ref, w1_ref, b1_ref, w2_ref, b2_ref, o_ref):
    # First Linear + ReLU (MXU matmul, f32 accumulation).
    h = jnp.dot(x_ref[...], w1_ref[...], preferred_element_type=jnp.float32)
    h = jnp.maximum(h + b1_ref[...], 0.0)
    # Second Linear + ReLU.
    y = jnp.dot(h, w2_ref[...], preferred_element_type=jnp.float32)
    o_ref[...] = jnp.maximum(y + b2_ref[...], 0.0)


def _round_up(n, m):
    return ((n + m - 1) // m) * m


def backbone_forward(x, w1, b1, w2, b2, *, max_tile=256):
    """x: (B, DIM_ORIG) f32 -> (B, F_DIM) f32.  Equivalent to Backbone.forward."""
    B, K = x.shape

    # Batch tile: multiple of 8 sublanes, capped at max_tile rows.
    TB = min(max_tile, _round_up(max(B, 8), 8))
    B_pad = _round_up(B, TB)

    # Zero-pad: batch rows (sliced off afterwards) and contraction dim
    # 201 -> 256 (zero rows of W1 contribute nothing -> bit-identical).
    x_p = jnp.zeros((B_pad, K_PAD), x.dtype).at[:B, :K].set(x)
    w1_p = jnp.zeros((K_PAD, F_DIM), w1.dtype).at[:K, :].set(w1)
    w2_p = w2                      # already (F_DIM, F_DIM), lane/sublane aligned
    b1_p = b1.reshape(1, F_DIM)
    b2_p = b2.reshape(1, F_DIM)

    grid = (B_pad // TB,)

    # Weights/biases: same block every grid step -> stay VMEM-resident.
    x_spec = pl.BlockSpec((TB, K_PAD), lambda i: (i, 0))
    w1_spec = pl.BlockSpec((K_PAD, F_DIM), lambda i: (0, 0))
    b1_spec = pl.BlockSpec((1, F_DIM), lambda i: (0, 0))
    w2_spec = pl.BlockSpec((F_DIM, F_DIM), lambda i: (0, 0))
    b2_spec = pl.BlockSpec((1, F_DIM), lambda i: (0, 0))
    o_spec = pl.BlockSpec((TB, F_DIM), lambda i: (i, 0))

    bytes_accessed = 4 * (B_pad * K_PAD          # x tiles
                          + K_PAD * F_DIM        # w1
                          + F_DIM * F_DIM        # w2
                          + 2 * F_DIM            # biases
                          + B_pad * F_DIM)       # output
    cost = pl.CostEstimate(
        flops=2 * B_pad * (K_PAD * F_DIM + F_DIM * F_DIM),
        transcendentals=0,
        bytes_accessed=bytes_accessed,
    )

    out = pl.pallas_call(
        mlp_kernel,
        out_shape=jax.ShapeDtypeStruct((B_pad, F_DIM), jnp.float32),
        grid=grid,
        in_specs=[x_spec, w1_spec, b1_spec, w2_spec, b2_spec],
        out_specs=o_spec,
        compiler_params=pltpu.CompilerParams(
            # Batch tiles are independent -> megacore-shardable on v7x;
            # harmless no-op on v5e/v6e.
            dimension_semantics=("parallel",),
            # Per-step working set (TB=256): x 0.25 MiB + out 0.5 MiB
            # double-buffered + resident weights ~1.3 MiB  =>  well under limit.
            vmem_limit_bytes=32 * 1024 * 1024,
        ),
        cost_estimate=cost,
    )(x_p, w1_p, b1_p, w2_p, b2_p)

    # Drop batch padding; x.view(x.shape[0], -1) is a no-op reshape for 2-D.
    return out[:B].reshape(B, -1)


def init_params(key):
    """Deterministic init mimicking PyTorch nn.Linear default U(-1/sqrt(fan_in), +)."""
    k1, k2, k3, k4 = jax.random.split(key, 4)
    lim1 = 1.0 / jnp.sqrt(jnp.float32(DIM_ORIG))
    lim2 = 1.0 / jnp.sqrt(jnp.float32(F_DIM))
    # Stored already transposed: (in, out).
    w1 = jax.random.uniform(k1, (DIM_ORIG, F_DIM), jnp.float32, -lim1, lim1)
    b1 = jax.random.uniform(k2, (F_DIM,), jnp.float32, -lim1, lim1)
    w2 = jax.random.uniform(k3, (F_DIM, F_DIM), jnp.float32, -lim2, lim2)
    b2 = jax.random.uniform(k4, (F_DIM,), jnp.float32, -lim2, lim2)
    return w1, b1, w2, b2


def reference_forward(x, w1, b1, w2, b2):
    h = jnp.maximum(x @ w1 + b1, 0.0)
    y = jnp.maximum(h @ w2 + b2, 0.0)
    return y.reshape(x.shape[0], -1)


if __name__ == "__main__":
    key = jax.random.PRNGKey(0)
    kx, kp = jax.random.split(key)
    B = 2
    x = jax.random.normal(kx, (B, DIM_ORIG), jnp.float32)
    w1, b1, w2, b2 = init_params(kp)

    out = backbone_forward(x, w1, b1, w2, b2)
    out = jax.block_until_ready(out)

    ref = reference_forward(x, w1, b1, w2, b2)
    assert out.shape == (B, F_DIM), out.shape
    assert jnp.allclose(out, ref, atol=1e-4, rtol=1e-4), "mismatch vs reference"

    print("KERNEL_OK")
</pallas_src>

<mosaic_0001>
module attributes {stable_mosaic.version = 11 : i64} {
  func.func @mlp_kernel(%arg0: i32, %arg1: memref<8x256xf32, #tpu.memory_space<vmem>>, %arg2: memref<256x512xf32, #tpu.memory_space<vmem>>, %arg3: memref<1x512xf32, #tpu.memory_space<vmem>>, %arg4: memref<512x512xf32, #tpu.memory_space<vmem>>, %arg5: memref<1x512xf32, #tpu.memory_space<vmem>>, %arg6: memref<8x512xf32, #tpu.memory_space<vmem>>) attributes {dimension_semantics = [#tpu.dimension_semantics<parallel>], iteration_bounds = array<i64: 1>, scalar_prefetch = 0 : i64, scratch_operands = 0 : i64, tpu.core_type = #tpu.core_type<tc>, window_params = [{transform_indices = @transform_0, window_bounds = array<i64: 8, 256>}, {pipeline_mode = #tpu.pipeline_mode<synchronous>, transform_indices = @transform_1, window_bounds = array<i64: 256, 512>}, {pipeline_mode = #tpu.pipeline_mode<synchronous>, transform_indices = @transform_2, window_bounds = array<i64: 1, 512>}, {pipeline_mode = #tpu.pipeline_mode<synchronous>, transform_indices = @transform_3, window_bounds = array<i64: 512, 512>}, {pipeline_mode = #tpu.pipeline_mode<synchronous>, transform_indices = @transform_4, window_bounds = array<i64: 1, 512>}, {transform_indices = @transform_5, window_bounds = array<i64: 8, 512>}]} {
    %c0 = arith.constant 0 : index
    %c0_0 = arith.constant 0 : index
    %0 = vector.load %arg1[%c0, %c0_0] : memref<8x256xf32, #tpu.memory_space<vmem>>, vector<8x256xf32>
    %c0_1 = arith.constant 0 : index
    %c0_2 = arith.constant 0 : index
    %1 = vector.load %arg2[%c0_1, %c0_2] : memref<256x512xf32, #tpu.memory_space<vmem>>, vector<256x512xf32>
    %cst = arith.constant dense<0.000000e+00> : vector<8x512xf32>
    %2 = tpu.matmul %0, %1, %cst {dimension_numbers = #tpu.dot_dimension_numbers<[1], [0], [0], [1], [0, 0, 1, 1], [], []>} : vector<8x256xf32>, vector<256x512xf32>, vector<8x512xf32> -> vector<8x512xf32>
    %c0_3 = arith.constant 0 : index
    %c0_4 = arith.constant 0 : index
    %3 = vector.load %arg3[%c0_3, %c0_4] : memref<1x512xf32, #tpu.memory_space<vmem>>, vector<1x512xf32>
    %4 = vector.broadcast %3 : vector<1x512xf32> to vector<8x512xf32>
    %5 = arith.addf %2, %4 : vector<8x512xf32>
    %cst_5 = arith.constant 0.000000e+00 : f32
    %6 = vector.broadcast %cst_5 : f32 to vector<8x512xf32>
    %7 = arith.maximumf %5, %6 : vector<8x512xf32>
    %c0_6 = arith.constant 0 : index
    %c0_7 = arith.constant 0 : index
    %8 = vector.load %arg4[%c0_6, %c0_7] : memref<512x512xf32, #tpu.memory_space<vmem>>, vector<512x512xf32>
    %cst_8 = arith.constant dense<0.000000e+00> : vector<8x512xf32>
    %9 = tpu.matmul %7, %8, %cst_8 {dimension_numbers = #tpu.dot_dimension_numbers<[1], [0], [0], [1], [0, 0, 1, 1], [], []>} : vector<8x512xf32>, vector<512x512xf32>, vector<8x512xf32> -> vector<8x512xf32>
    %c0_9 = arith.constant 0 : index
    %c0_10 = arith.constant 0 : index
    %10 = vector.load %arg5[%c0_9, %c0_10] : memref<1x512xf32, #tpu.memory_space<vmem>>, vector<1x512xf32>
    %11 = vector.broadcast %10 : vector<1x512xf32> to vector<8x512xf32>
    %12 = arith.addf %9, %11 : vector<8x512xf32>
    %cst_11 = arith.constant 0.000000e+00 : f32
    %13 = vector.broadcast %cst_11 : f32 to vector<8x512xf32>
    %14 = arith.maximumf %12, %13 : vector<8x512xf32>
    %c0_12 = arith.constant 0 : index
    %c0_13 = arith.constant 0 : index
    %15 = vector.load %arg6[%c0_12, %c0_13] : memref<8x512xf32, #tpu.memory_space<vmem>>, vector<8x512xf32>
    tpu.vector_store %arg6[%c0_12, %c0_13], %14 {strides = array<i32>} : memref<8x512xf32, #tpu.memory_space<vmem>>, vector<8x512xf32>,
    return
  }
  func.func @transform_0(%arg0: i32) -> (i32, i32) {
    %c0_i32 = arith.constant 0 : i32
    %c0_i32_0 = arith.constant 0 : i32
    return %arg0, %c0_i32 : i32, i32
  }
  func.func @transform_1(%arg0: i32) -> (i32, i32) {
    %c0_i32 = arith.constant 0 : i32
    %c0_i32_0 = arith.constant 0 : i32
    %c0_i32_1 = arith.constant 0 : i32
    return %c0_i32, %c0_i32_0 : i32, i32
  }
  func.func @transform_2(%arg0: i32) -> (i32, i32) {
    %c0_i32 = arith.constant 0 : i32
    %c0_i32_0 = arith.constant 0 : i32
    %c0_i32_1 = arith.constant 0 : i32
    return %c0_i32, %c0_i32_0 : i32, i32
  }
  func.func @transform_3(%arg0: i32) -> (i32, i32) {
    %c0_i32 = arith.constant 0 : i32
    %c0_i32_0 = arith.constant 0 : i32
    %c0_i32_1 = arith.constant 0 : i32
    return %c0_i32, %c0_i32_0 : i32, i32
  }
  func.func @transform_4(%arg0: i32) -> (i32, i32) {
    %c0_i32 = arith.constant 0 : i32
    %c0_i32_0 = arith.constant 0 : i32
    %c0_i32_1 = arith.constant 0 : i32
    return %c0_i32, %c0_i32_0 : i32, i32
  }
  func.func @transform_5(%arg0: i32) -> (i32, i32) {
    %c0_i32 = arith.constant 0 : i32
    %c0_i32_0 = arith.constant 0 : i32
    return %arg0, %c0_i32 : i32, i32
  }
}

</mosaic_0001>

<llo_original>
// kernel: tpu_custom_call.1
$region0: #{tpu_custom_call.1}
  #allocation0 [shape = 'u32[]', space=smem, size = 0x4, offset = 0x4, fixed_abs, tag = 'smem constant byte address 0x4 - core index']
  #allocation1 [shape = 'u32[144,128]{1,0:T(1,128)}', space=vmem, size = 0x12000, scoped, tag = 'internal scratch']
  %s0 = inlined_call_operand.hbm [shape: f32[8,256], index: 0, kind: input, shape index: {}]
  %s1 = inlined_call_operand.hbm [shape: f32[256,512], index: 1, kind: input, shape index: {}]
  %s2 = inlined_call_operand.vmem [shape: f32[1,512], index: 2, kind: input, shape index: {}]
  %s3 = inlined_call_operand.hbm [shape: f32[512,512], index: 3, kind: input, shape index: {}]
  %s4 = inlined_call_operand.vmem [shape: f32[1,512], index: 4, kind: input, shape index: {}]
  %s5 = inlined_call_operand.hbm [shape: f32[8,512], index: 5, kind: output, shape index: {}]
  %s6 = sld [smem:[#allocation0]]
  $region42: #{tpu_custom_call.1} parent=0
    _
  %s8 = ssub.s32 1, %s6
  %s9 = scalar_select 0, %s8, %s6
  $region1: #{tpu_custom_call.1} parent=0
    #allocation2 [shape = 'u8[8192]{0}', space=vmem, size = 0x2000, scoped, tag = 'input window, operand 0, single buffered']
    #allocation3 [shape = 's32[1]{0}', space=sflag, size = 0x4, scoped, tag = 'scoped memory for tpu_custom_call.1']
    #allocation4 [shape = 's32[1]{0}', space=sflag, size = 0x4, scoped, tag = 'scoped memory for tpu_custom_call.1']
    #allocation5 [shape = 'u8[524288]{0}', space=vmem, size = 0x80000, scoped, tag = 'input window, operand 1, single buffered']
    #allocation6 [shape = 's32[1]{0}', space=sflag, size = 0x4, scoped, tag = 'scoped memory for tpu_custom_call.1']
    #allocation7 [shape = 'u8[1048576]{0}', space=vmem, size = 0x100000, scoped, tag = 'input window, operand 3, single buffered']
    #allocation8 [shape = 'u8[16384]{0}', space=vmem, size = 0x4000, scoped, tag = 'output window, operand 0, single buffered']
    %10 = vsyncpa [#allocation3], 0
    %11 = vsyncpa [#allocation6], 0
    %12 = vsyncpa [#allocation4], 0
    // Predicated region
    $region2: #{tpu_custom_call.1} parent=1 // pred_check
      _
    $region3: #{tpu_custom_call.1} parent=1 // pred_check_branch
      %14 = sbr.rel (0) target = $region5
    $region4: #{tpu_custom_call.1} parent=1 // pred_region
      %s16 = ssub.s32 256, 256
      %17 = vsyncadd [#allocation3], %s16
      %s19 = sshll.u32 [#allocation2], 4
      %s20 = int_to_ptr.vmem [resolvable:$true] %s19
      %22 = dma.hbm_to_vmem [thread:$0]  %s0, 256, %s20, [#allocation3]
    $region5: #{tpu_custom_call.1} parent=1 // pred_fallthru
      _
    // Predicated region
    $region6: #{tpu_custom_call.1} parent=1 // pred_check
      _
    $region7: #{tpu_custom_call.1} parent=1 // pred_check_branch
      %24 = sbr.rel (0) target = $region9
    $region8: #{tpu_custom_call.1} parent=1 // pred_region
      %s26 = ssub.s32 16384, 16384
      %27 = vsyncadd [#allocation6], %s26
      %s28 = sshll.u32 [#allocation5], 4
      %s29 = int_to_ptr.vmem [resolvable:$true] %s28
      %34 = dma.hbm_to_vmem [thread:$0]  %s1, 16384, %s29, [#allocation6], 512, 512, 32
    $region9: #{tpu_custom_call.1} parent=1 // pred_fallthru
      _
    // Predicated region
    $region10: #{tpu_custom_call.1} parent=1 // pred_check
      _
    $region11: #{tpu_custom_call.1} parent=1 // pred_check_branch
      %36 = sbr.rel (0) target = $region13
    $region12: #{tpu_custom_call.1} parent=1 // pred_region
      _
    $region13: #{tpu_custom_call.1} parent=1 // pred_fallthru
      _
    // Predicated region
    $region14: #{tpu_custom_call.1} parent=1 // pred_check
      _
    $region15: #{tpu_custom_call.1} parent=1 // pred_check_branch
      %38 = sbr.rel (0) target = $region17
    $region16: #{tpu_custom_call.1} parent=1 // pred_region
      %s40 = ssub.s32 32768, 32768
      %41 = vsyncadd [#allocation6], %s40
      %s42 = sshll.u32 [#allocation7], 4
      %s43 = int_to_ptr.vmem [resolvable:$true] %s42
      %48 = dma.hbm_to_vmem [thread:$0]  %s3, 32768, %s43, [#allocation6], 512, 512, 32
    $region17: #{tpu_custom_call.1} parent=1 // pred_fallthru
      _
    // Predicated region
    $region18: #{tpu_custom_call.1} parent=1 // pred_check
      _
    $region19: #{tpu_custom_call.1} parent=1 // pred_check_branch
      %50 = sbr.rel (0) target = $region21
    $region20: #{tpu_custom_call.1} parent=1 // pred_region
      _
    $region21: #{tpu_custom_call.1} parent=1 // pred_fallthru
      _
    // Predicated region
    $region22: #{tpu_custom_call.1} parent=1 // pred_check
      _
    $region23: #{tpu_custom_call.1} parent=1 // pred_check_branch
      %52 = sbr.rel (0) target = $region25
    $region24: #{tpu_custom_call.1} parent=1 // pred_region
      %53 = dma.done [#allocation3], 256
    $region25: #{tpu_custom_call.1} parent=1 // pred_fallthru
      _
    // Predicated region
    $region26: #{tpu_custom_call.1} parent=1 // pred_check
      _
    $region27: #{tpu_custom_call.1} parent=1 // pred_check_branch
      %55 = sbr.rel (0) target = $region29
    $region28: #{tpu_custom_call.1} parent=1 // pred_region
      %56 = dma.done [#allocation6], 16384
    $region29: #{tpu_custom_call.1} parent=1 // pred_fallthru
      _
    // Predicated region
    $region30: #{tpu_custom_call.1} parent=1 // pred_check
      _
    $region31: #{tpu_custom_call.1} parent=1 // pred_check_branch
      %58 = sbr.rel (0) target = $region33
    $region32: #{tpu_custom_call.1} parent=1 // pred_region
      %59 = dma.done [#allocation6], 32768
    $region33: #{tpu_custom_call.1} parent=1 // pred_fallthru
      _
    %v60 = vld [vmem:[#allocation2] sm:$0xff]
    %v61 = vld [vmem:[#allocation2 + $0x8] sm:$0xff]
    %v62 = vld [vmem:[#allocation5] sm:$0xff]
    %v63 = vld [vmem:[#allocation5 + $0x8] sm:$0xff]
    %v64 = vld [vmem:[#allocation5 + $0x10] sm:$0xff]
    %v65 = vld [vmem:[#allocation5 + $0x18] sm:$0xff]
    %v66 = vld [vmem:[#allocation5 + $0x20] sm:$0xff]
    %v67 = vld [vmem:[#allocation5 + $0x28] sm:$0xff]
    %v68 = vld [vmem:[#allocation5 + $0x30] sm:$0xff]
    %v69 = vld [vmem:[#allocation5 + $0x38] sm:$0xff]
    %v70 = vld [vmem:[#allocation5 + $0x40] sm:$0xff]
    %v71 = vld [vmem:[#allocation5 + $0x48] sm:$0xff]
    %v72 = vld [vmem:[#allocation5 + $0x50] sm:$0xff]
    %v73 = vld [vmem:[#allocation5 + $0x58] sm:$0xff]
    %v74 = vld [vmem:[#allocation5 + $0x60] sm:$0xff]
    %v75 = vld [vmem:[#allocation5 + $0x68] sm:$0xff]
    %v76 = vld [vmem:[#allocation5 + $0x70] sm:$0xff]
    %v77 = vld [vmem:[#allocation5 + $0x78] sm:$0xff]
    %v78 = vld [vmem:[#allocation5 + $0x80] sm:$0xff]
    %v79 = vld [vmem:[#allocation5 + $0x88] sm:$0xff]
    %v80 = vld [vmem:[#allocation5 + $0x90] sm:$0xff]
    %v81 = vld [vmem:[#allocation5 + $0x98] sm:$0xff]
    %v82 = vld [vmem:[#allocation5 + $0xa0] sm:$0xff]
    %v83 = vld [vmem:[#allocation5 + $0xa8] sm:$0xff]
    %v84 = vld [vmem:[#allocation5 + $0xb0] sm:$0xff]
    %v85 = vld [vmem:[#allocation5 + $0xb8] sm:$0xff]
    %v86 = vld [vmem:[#allocation5 + $0xc0] sm:$0xff]
    %v87 = vld [vmem:[#allocation5 + $0xc8] sm:$0xff]
    %v88 = vld [vmem:[#allocation5 + $0xd0] sm:$0xff]
    %v89 = vld [vmem:[#allocation5 + $0xd8] sm:$0xff]
    %v90 = vld [vmem:[#allocation5 + $0xe0] sm:$0xff]
    %v91 = vld [vmem:[#allocation5 + $0xe8] sm:$0xff]
    %v92 = vld [vmem:[#allocation5 + $0xf0] sm:$0xff]
    %v93 = vld [vmem:[#allocation5 + $0xf8] sm:$0xff]
    %v94 = vld [vmem:[#allocation5 + $0x100] sm:$0xff]
    %v95 = vld [vmem:[#allocation5 + $0x108] sm:$0xff]
    %v96 = vld [vmem:[#allocation5 + $0x110] sm:$0xff]
    %v97 = vld [vmem:[#allocation5 + $0x118] sm:$0xff]
    %v98 = vld [vmem:[#allocation5 + $0x120] sm:$0xff]
    %v99 = vld [vmem:[#allocation5 + $0x128] sm:$0xff]
    %v100 = vld [vmem:[#allocation5 + $0x130] sm:$0xff]
    %v101 = vld [vmem:[#allocation5 + $0x138] sm:$0xff]
    %v102 = vld [vmem:[#allocation5 + $0x140] sm:$0xff]
    %v103 = vld [vmem:[#allocation5 + $0x148] sm:$0xff]
    %v104 = vld [vmem:[#allocation5 + $0x150] sm:$0xff]
    %v105 = vld [vmem:[#allocation5 + $0x158] sm:$0xff]
    %v106 = vld [vmem:[#allocation5 + $0x160] sm:$0xff]
    %v107 = vld [vmem:[#allocation5 + $0x168] sm:$0xff]
    %v108 = vld [vmem:[#allocation5 + $0x170] sm:$0xff]
    %v109 = vld [vmem:[#allocation5 + $0x178] sm:$0xff]
    %v110 = vld [vmem:[#allocation5 + $0x180] sm:$0xff]
    %v111 = vld [vmem:[#allocation5 + $0x188] sm:$0xff]
    %v112 = vld [vmem:[#allocation5 + $0x190] sm:$0xff]
    %v113 = vld [vmem:[#allocation5 + $0x198] sm:$0xff]
    %v114 = vld [vmem:[#allocation5 + $0x1a0] sm:$0xff]
    %v115 = vld [vmem:[#allocation5 + $0x1a8] sm:$0xff]
    %v116 = vld [vmem:[#allocation5 + $0x1b0] sm:$0xff]
    %v117 = vld [vmem:[#allocation5 + $0x1b8] sm:$0xff]
    %v118 = vld [vmem:[#allocation5 + $0x1c0] sm:$0xff]
    %v119 = vld [vmem:[#allocation5 + $0x1c8] sm:$0xff]
    %v120 = vld [vmem:[#allocation5 + $0x1d0] sm:$0xff]
    %v121 = vld [vmem:[#allocation5 + $0x1d8] sm:$0xff]
    %v122 = vld [vmem:[#allocation5 + $0x1e0] sm:$0xff]
    %v123 = vld [vmem:[#allocation5 + $0x1e8] sm:$0xff]
    %v124 = vld [vmem:[#allocation5 + $0x1f0] sm:$0xff]
    %v125 = vld [vmem:[#allocation5 + $0x1f8] sm:$0xff]
    %v126 = vld [vmem:[#allocation5 + $0x200] sm:$0xff]
    %v127 = vld [vmem:[#allocation5 + $0x208] sm:$0xff]
    %v128 = vld [vmem:[#allocation5 + $0x210] sm:$0xff]
    %v129 = vld [vmem:[#allocation5 + $0x218] sm:$0xff]
    %v130 = vld [vmem:[#allocation5 + $0x220] sm:$0xff]
    %v131 = vld [vmem:[#allocation5 + $0x228] sm:$0xff]
    %v132 = vld [vmem:[#allocation5 + $0x230] sm:$0xff]
    %v133 = vld [vmem:[#allocation5 + $0x238] sm:$0xff]
    %v134 = vld [vmem:[#allocation5 + $0x240] sm:$0xff]
    %v135 = vld [vmem:[#allocation5 + $0x248] sm:$0xff]
    %v136 = vld [vmem:[#allocation5 + $0x250] sm:$0xff]
    %v137 = vld [vmem:[#allocation5 + $0x258] sm:$0xff]
    %v138 = vld [vmem:[#allocation5 + $0x260] sm:$0xff]
    %v139 = vld [vmem:[#allocation5 + $0x268] sm:$0xff]
    %v140 = vld [vmem:[#allocation5 + $0x270] sm:$0xff]
    %v141 = vld [vmem:[#allocation5 + $0x278] sm:$0xff]
    %v142 = vld [vmem:[#allocation5 + $0x280] sm:$0xff]
    %v143 = vld [vmem:[#allocation5 + $0x288] sm:$0xff]
    %v144 = vld [vmem:[#allocation5 + $0x290] sm:$0xff]
    %v145 = vld [vmem:[#allocation5 + $0x298] sm:$0xff]
    %v146 = vld [vmem:[#allocation5 + $0x2a0] sm:$0xff]
    %v147 = vld [vmem:[#allocation5 + $0x2a8] sm:$0xff]
    %v148 = vld [vmem:[#allocation5 + $0x2b0] sm:$0xff]
    %v149 = vld [vmem:[#allocation5 + $0x2b8] sm:$0xff]
    %v150 = vld [vmem:[#allocation5 + $0x2c0] sm:$0xff]
    %v151 = vld [vmem:[#allocation5 + $0x2c8] sm:$0xff]
    %v152 = vld [vmem:[#allocation5 + $0x2d0] sm:$0xff]
    %v153 = vld [vmem:[#allocation5 + $0x2d8] sm:$0xff]
    %v154 = vld [vmem:[#allocation5 + $0x2e0] sm:$0xff]
    %v155 = vld [vmem:[#allocation5 + $0x2e8] sm:$0xff]
    %v156 = vld [vmem:[#allocation5 + $0x2f0] sm:$0xff]
    %v157 = vld [vmem:[#allocation5 + $0x2f8] sm:$0xff]
    %v158 = vld [vmem:[#allocation5 + $0x300] sm:$0xff]
    %v159 = vld [vmem:[#allocation5 + $0x308] sm:$0xff]
    %v160 = vld [vmem:[#allocation5 + $0x310] sm:$0xff]
    %v161 = vld [vmem:[#allocation5 + $0x318] sm:$0xff]
    %v162 = vld [vmem:[#allocation5 + $0x320] sm:$0xff]
    %v163 = vld [vmem:[#allocation5 + $0x328] sm:$0xff]
    %v164 = vld [vmem:[#allocation5 + $0x330] sm:$0xff]
    %v165 = vld [vmem:[#allocation5 + $0x338] sm:$0xff]
    %v166 = vld [vmem:[#allocation5 + $0x340] sm:$0xff]
    %v167 = vld [vmem:[#allocation5 + $0x348] sm:$0xff]
    %v168 = vld [vmem:[#allocation5 + $0x350] sm:$0xff]
    %v169 = vld [vmem:[#allocation5 + $0x358] sm:$0xff]
    %v170 = vld [vmem:[#allocation5 + $0x360] sm:$0xff]
    %v171 = vld [vmem:[#allocation5 + $0x368] sm:$0xff]
    %v172 = vld [vmem:[#allocation5 + $0x370] sm:$0xff]
    %v173 = vld [vmem:[#allocation5 + $0x378] sm:$0xff]
    %v174 = vld [vmem:[#allocation5 + $0x380] sm:$0xff]
    %v175 = vld [vmem:[#allocation5 + $0x388] sm:$0xff]
    %v176 = vld [vmem:[#allocation5 + $0x390] sm:$0xff]
    %v177 = vld [vmem:[#allocation5 + $0x398] sm:$0xff]
    %v178 = vld [vmem:[#allocation5 + $0x3a0] sm:$0xff]
    %v179 = vld [vmem:[#allocation5 + $0x3a8] sm:$0xff]
    %v180 = vld [vmem:[#allocation5 + $0x3b0] sm:$0xff]
    %v181 = vld [vmem:[#allocation5 + $0x3b8] sm:$0xff]
    %v182 = vld [vmem:[#allocation5 + $0x3c0] sm:$0xff]
    %v183 = vld [vmem:[#allocation5 + $0x3c8] sm:$0xff]
    %v184 = vld [vmem:[#allocation5 + $0x3d0] sm:$0xff]
    %v185 = vld [vmem:[#allocation5 + $0x3d8] sm:$0xff]
    %v186 = vld [vmem:[#allocation5 + $0x3e0] sm:$0xff]
    %v187 = vld [vmem:[#allocation5 + $0x3e8] sm:$0xff]
    %v188 = vld [vmem:[#allocation5 + $0x3f0] sm:$0xff]
    %v189 = vld [vmem:[#allocation5 + $0x3f8] sm:$0xff]
    %v190 = vld [vmem:[%s2] sm:$0xf]
    %v192 = vlaneseq
    %v193 = vshrl.u32 %v192, 7
    %v194 = vsub.s32 0, %v193
    %v195 = vrot.slane %v190, %v194
    %v196 = vlaneseq
    %v197 = vshrl.u32 %v196, 7
    %v198 = vsub.s32 1, %v197
    %v199 = vrot.slane %v190, %v198
    %v200 = vlaneseq
    %v201 = vshrl.u32 %v200, 7
    %v202 = vsub.s32 2, %v201
    %v203 = vrot.slane %v190, %v202
    %v204 = vlaneseq
    %v205 = vshrl.u32 %v204, 7
    %v206 = vsub.s32 3, %v205
    %v207 = vrot.slane %v190, %v206
    %212 = vmatprep.subr.mxu0 %v63
    %213 = vmatpush1.msra.mxu0 %v62
    %214 = vmatprep.subr.mxu0 %v67
    %215 = vmatpush1.msra.mxu0 %v66
    %216 = vmatprep.subr.mxu0 %v71
    %217 = vmatpush1.msra.mxu0 %v70
    %218 = vmatprep.subr.mxu0 %v75
    %219 = vmatpush1.msra.mxu0 %v74
    %220 = vmatprep.subr.mxu0 %v79
    %221 = vmatpush1.msra.mxu0 %v78
    %222 = vmatprep.subr.mxu0 %v83
    %223 = vmatpush1.msra.mxu0 %v82
    %224 = vmatprep.subr.mxu0 %v87
    %225 = vmatpush1.msra.mxu0 %v86
    %226 = vmatprep.subr.mxu0 %v91
    %227 = vmatpush1.msra.mxu0 %v90
    %228 = vmatprep.subr.mxu0 %v95
    %229 = vmatpush1.msra.mxu0 %v94
    %230 = vmatprep.subr.mxu0 %v99
    %231 = vmatpush1.msra.mxu0 %v98
    %232 = vmatprep.subr.mxu0 %v103
    %233 = vmatpush1.msra.mxu0 %v102
    %234 = vmatprep.subr.mxu0 %v107
    %235 = vmatpush1.msra.mxu0 %v106
    %236 = vmatprep.subr.mxu0 %v111
    %237 = vmatpush1.msra.mxu0 %v110
    %238 = vmatprep.subr.mxu0 %v115
    %239 = vmatpush1.msra.mxu0 %v114
    %240 = vmatprep.subr.mxu0 %v119
    %241 = vmatpush1.msra.mxu0 %v118
    %242 = vmatprep.subr.mxu0 %v123
    %243 = vmatpush1.msra.mxu0 %v122
    %244 = vmatprep.subr.mxu0 %v127
    %245 = vmatpush1.msra.mxu0 %v126
    %246 = vmatprep.subr.mxu0 %v131
    %247 = vmatpush1.msra.mxu0 %v130
    %248 = vmatprep.subr.mxu0 %v135
    %249 = vmatpush1.msra.mxu0 %v134
    %250 = vmatprep.subr.mxu0 %v139
    %251 = vmatpush1.msra.mxu0 %v138
    %252 = vmatprep.subr.mxu0 %v143
    %253 = vmatpush1.msra.mxu0 %v142
    %254 = vmatprep.subr.mxu0 %v147
    %255 = vmatpush1.msra.mxu0 %v146
    %256 = vmatprep.subr.mxu0 %v151
    %257 = vmatpush1.msra.mxu0 %v150
    %258 = vmatprep.subr.mxu0 %v155
    %259 = vmatpush1.msra.mxu0 %v154
    %260 = vmatprep.subr.mxu0 %v159
    %261 = vmatpush1.msra.mxu0 %v158
    %262 = vmatprep.subr.mxu0 %v163
    %263 = vmatpush1.msra.mxu0 %v162
    %264 = vmatprep.subr.mxu0 %v167
    %265 = vmatpush1.msra.mxu0 %v166
    %266 = vmatprep.subr.mxu0 %v171
    %267 = vmatpush1.msra.mxu0 %v170
    %268 = vmatprep.subr.mxu0 %v175
    %269 = vmatpush1.msra.mxu0 %v174
    %270 = vmatprep.subr.mxu0 %v179
    %271 = vmatpush1.msra.mxu0 %v178
    %272 = vmatprep.subr.mxu0 %v183
    %273 = vmatpush1.msra.mxu0 %v182
    %274 = vmatprep.subr.mxu0 %v187
    %275 = vmatpush1.msra.mxu0 %v186
    %276 = vmatprep.mubr.f32.mxu0 %v61
    %277 = vmatmul.mubr.f32.gmra.mrb[0].mxu0 %v60
    %v278 = vpop.f32.mrb[0].mxu0
    %v279 = vadd.f32 %v195, %v278
    %v280 = vpop.f32.mrb[0].mxu0
    %v281 = vadd.f32 %v199, %v280
    %282 = vdwg.mxu0
    %283 = vmatprep.subr.mxu0 %v65
    %284 = vmatpush1.msra.mxu0 %v64
    %285 = vmatprep.subr.mxu0 %v69
    %286 = vmatpush1.msra.mxu0 %v68
    %287 = vmatprep.subr.mxu0 %v73
    %288 = vmatpush1.msra.mxu0 %v72
    %289 = vmatprep.subr.mxu0 %v77
    %290 = vmatpush1.msra.mxu0 %v76
    %291 = vmatprep.subr.mxu0 %v81
    %292 = vmatpush1.msra.mxu0 %v80
    %293 = vmatprep.subr.mxu0 %v85
    %294 = vmatpush1.msra.mxu0 %v84
    %295 = vmatprep.subr.mxu0 %v89
    %296 = vmatpush1.msra.mxu0 %v88
    %297 = vmatprep.subr.mxu0 %v93
    %298 = vmatpush1.msra.mxu0 %v92
    %299 = vmatprep.subr.mxu0 %v97
    %300 = vmatpush1.msra.mxu0 %v96
    %301 = vmatprep.subr.mxu0 %v101
    %302 = vmatpush1.msra.mxu0 %v100
    %303 = vmatprep.subr.mxu0 %v105
    %304 = vmatpush1.msra.mxu0 %v104
    %305 = vmatprep.subr.mxu0 %v109
    %306 = vmatpush1.msra.mxu0 %v108
    %307 = vmatprep.subr.mxu0 %v113
    %308 = vmatpush1.msra.mxu0 %v112
    %309 = vmatprep.subr.mxu0 %v117
    %310 = vmatpush1.msra.mxu0 %v116
    %311 = vmatprep.subr.mxu0 %v121
    %312 = vmatpush1.msra.mxu0 %v120
    %313 = vmatprep.subr.mxu0 %v125
    %314 = vmatpush1.msra.mxu0 %v124
    %315 = vmatprep.subr.mxu0 %v129
    %316 = vmatpush1.msra.mxu0 %v128
    %317 = vmatprep.subr.mxu0 %v133
    %318 = vmatpush1.msra.mxu0 %v132
    %319 = vmatprep.subr.mxu0 %v137
    %320 = vmatpush1.msra.mxu0 %v136
    %321 = vmatprep.subr.mxu0 %v141
    %322 = vmatpush1.msra.mxu0 %v140
    %323 = vmatprep.subr.mxu0 %v145
    %324 = vmatpush1.msra.mxu0 %v144
    %325 = vmatprep.subr.mxu0 %v149
    %326 = vmatpush1.msra.mxu0 %v148
    %327 = vmatprep.subr.mxu0 %v153
    %328 = vmatpush1.msra.mxu0 %v152
    %329 = vmatprep.subr.mxu0 %v157
    %330 = vmatpush1.msra.mxu0 %v156
    %331 = vmatprep.subr.mxu0 %v161
    %332 = vmatpush1.msra.mxu0 %v160
    %333 = vmatprep.subr.mxu0 %v165
    %334 = vmatpush1.msra.mxu0 %v164
    %335 = vmatprep.subr.mxu0 %v169
    %336 = vmatpush1.msra.mxu0 %v168
    %337 = vmatprep.subr.mxu0 %v173
    %338 = vmatpush1.msra.mxu0 %v172
    %339 = vmatprep.subr.mxu0 %v177
    %340 = vmatpush1.msra.mxu0 %v176
    %341 = vmatprep.subr.mxu0 %v181
    %342 = vmatpush1.msra.mxu0 %v180
    %343 = vmatprep.subr.mxu0 %v185
    %344 = vmatpush1.msra.mxu0 %v184
    %345 = vmatprep.subr.mxu0 %v189
    %346 = vmatpush1.msra.mxu0 %v188
    %347 = vmatprep.mubr.f32.mxu0 %v61
    %348 = vmatmul.mubr.f32.gmra.mrb[0].mxu0 %v60
    %v349 = vpop.f32.mrb[0].mxu0
    %v350 = vadd.f32 %v203, %v349
    %v351 = vpop.f32.mrb[0].mxu0
    %v352 = vadd.f32 %v207, %v351
    %353 = vdwg.mxu0
    %v354 = vmax.f32 %v279, 0.0
    %v355 = vmax.f32 %v281, 0.0
    %v356 = vmax.f32 %v350, 0.0
    %v357 = vmax.f32 %v352, 0.0
    %v358 = vld [vmem:[#allocation7] sm:$0xff]
    %v359 = vld [vmem:[#allocation7 + $0x8] sm:$0xff]
    %v360 = vld [vmem:[#allocation7 + $0x10] sm:$0xff]
    %v361 = vld [vmem:[#allocation7 + $0x18] sm:$0xff]
    %v362 = vld [vmem:[#allocation7 + $0x20] sm:$0xff]
    %v363 = vld [vmem:[#allocation7 + $0x28] sm:$0xff]
    %v364 = vld [vmem:[#allocation7 + $0x30] sm:$0xff]
    %v365 = vld [vmem:[#allocation7 + $0x38] sm:$0xff]
    %v366 = vld [vmem:[#allocation7 + $0x40] sm:$0xff]
    %v367 = vld [vmem:[#allocation7 + $0x48] sm:$0xff]
    %v368 = vld [vmem:[#allocation7 + $0x50] sm:$0xff]
    %v369 = vld [vmem:[#allocation7 + $0x58] sm:$0xff]
    %v370 = vld [vmem:[#allocation7 + $0x60] sm:$0xff]
    %v371 = vld [vmem:[#allocation7 + $0x68] sm:$0xff]
    %v372 = vld [vmem:[#allocation7 + $0x70] sm:$0xff]
    %v373 = vld [vmem:[#allocation7 + $0x78] sm:$0xff]
    %v374 = vld [vmem:[#allocation7 + $0x80] sm:$0xff]
    %v375 = vld [vmem:[#allocation7 + $0x88] sm:$0xff]
    %v376 = vld [vmem:[#allocation7 + $0x90] sm:$0xff]
    %v377 = vld [vmem:[#allocation7 + $0x98] sm:$0xff]
    %v378 = vld [vmem:[#allocation7 + $0xa0] sm:$0xff]
    %v379 = vld [vmem:[#allocation7 + $0xa8] sm:$0xff]
    %v380 = vld [vmem:[#allocation7 + $0xb0] sm:$0xff]
    %v381 = vld [vmem:[#allocation7 + $0xb8] sm:$0xff]
    %v382 = vld [vmem:[#allocation7 + $0xc0] sm:$0xff]
    %v383 = vld [vmem:[#allocation7 + $0xc8] sm:$0xff]
    %v384 = vld [vmem:[#allocation7 + $0xd0] sm:$0xff]
    %v385 = vld [vmem:[#allocation7 + $0xd8] sm:$0xff]
    %v386 = vld [vmem:[#allocation7 + $0xe0] sm:$0xff]
    %v387 = vld [vmem:[#allocation7 + $0xe8] sm:$0xff]
    %v388 = vld [vmem:[#allocation7 + $0xf0] sm:$0xff]
    %v389 = vld [vmem:[#allocation7 + $0xf8] sm:$0xff]
    %v390 = vld [vmem:[#allocation7 + $0x100] sm:$0xff]
    %v391 = vld [vmem:[#allocation7 + $0x108] sm:$0xff]
    %v392 = vld [vmem:[#allocation7 + $0x110] sm:$0xff]
    %v393 = vld [vmem:[#allocation7 + $0x118] sm:$0xff]
    %v394 = vld [vmem:[#allocation7 + $0x120] sm:$0xff]
    %v395 = vld [vmem:[#allocation7 + $0x128] sm:$0xff]
    %v396 = vld [vmem:[#allocation7 + $0x130] sm:$0xff]
    %v397 = vld [vmem:[#allocation7 + $0x138] sm:$0xff]
    %v398 = vld [vmem:[#allocation7 + $0x140] sm:$0xff]
    %v399 = vld [vmem:[#allocation7 + $0x148] sm:$0xff]
    %v400 = vld [vmem:[#allocation7 + $0x150] sm:$0xff]
    %v401 = vld [vmem:[#allocation7 + $0x158] sm:$0xff]
    %v402 = vld [vmem:[#allocation7 + $0x160] sm:$0xff]
    %v403 = vld [vmem:[#allocation7 + $0x168] sm:$0xff]
    %v404 = vld [vmem:[#allocation7 + $0x170] sm:$0xff]
    %v405 = vld [vmem:[#allocation7 + $0x178] sm:$0xff]
    %v406 = vld [vmem:[#allocation7 + $0x180] sm:$0xff]
    %v407 = vld [vmem:[#allocation7 + $0x188] sm:$0xff]
    %v408 = vld [vmem:[#allocation7 + $0x190] sm:$0xff]
    %v409 = vld [vmem:[#allocation7 + $0x198] sm:$0xff]
    %v410 = vld [vmem:[#allocation7 + $0x1a0] sm:$0xff]
    %v411 = vld [vmem:[#allocation7 + $0x1a8] sm:$0xff]
    %v412 = vld [vmem:[#allocation7 + $0x1b0] sm:$0xff]
    %v413 = vld [vmem:[#allocation7 + $0x1b8] sm:$0xff]
    %v414 = vld [vmem:[#allocation7 + $0x1c0] sm:$0xff]
    %v415 = vld [vmem:[#allocation7 + $0x1c8] sm:$0xff]
    %v416 = vld [vmem:[#allocation7 + $0x1d0] sm:$0xff]
    %v417 = vld [vmem:[#allocation7 + $0x1d8] sm:$0xff]
    %v418 = vld [vmem:[#allocation7 + $0x1e0] sm:$0xff]
    %v419 = vld [vmem:[#allocation7 + $0x1e8] sm:$0xff]
    %v420 = vld [vmem:[#allocation7 + $0x1f0] sm:$0xff]
    %v421 = vld [vmem:[#allocation7 + $0x1f8] sm:$0xff]
    %v422 = vld [vmem:[#allocation7 + $0x200] sm:$0xff]
    %v423 = vld [vmem:[#allocation7 + $0x208] sm:$0xff]
    %v424 = vld [vmem:[#allocation7 + $0x210] sm:$0xff]
    %v425 = vld [vmem:[#allocation7 + $0x218] sm:$0xff]
    %v426 = vld [vmem:[#allocation7 + $0x220] sm:$0xff]
    %v427 = vld [vmem:[#allocation7 + $0x228] sm:$0xff]
    %v428 = vld [vmem:[#allocation7 + $0x230] sm:$0xff]
    %v429 = vld [vmem:[#allocation7 + $0x238] sm:$0xff]
    %v430 = vld [vmem:[#allocation7 + $0x240] sm:$0xff]
    %v431 = vld [vmem:[#allocation7 + $0x248] sm:$0xff]
    %v432 = vld [vmem:[#allocation7 + $0x250] sm:$0xff]
    %v433 = vld [vmem:[#allocation7 + $0x258] sm:$0xff]
    %v434 = vld [vmem:[#allocation7 + $0x260] sm:$0xff]
    %v435 = vld [vmem:[#allocation7 + $0x268] sm:$0xff]
    %v436 = vld [vmem:[#allocation7 + $0x270] sm:$0xff]
    %v437 = vld [vmem:[#allocation7 + $0x278] sm:$0xff]
    %v438 = vld [vmem:[#allocation7 + $0x280] sm:$0xff]
    %v439 = vld [vmem:[#allocation7 + $0x288] sm:$0xff]
    %v440 = vld [vmem:[#allocation7 + $0x290] sm:$0xff]
    %v441 = vld [vmem:[#allocation7 + $0x298] sm:$0xff]
    %v442 = vld [vmem:[#allocation7 + $0x2a0] sm:$0xff]
    %v443 = vld [vmem:[#allocation7 + $0x2a8] sm:$0xff]
    %v444 = vld [vmem:[#allocation7 + $0x2b0] sm:$0xff]
    %v445 = vld [vmem:[#allocation7 + $0x2b8] sm:$0xff]
    %v446 = vld [vmem:[#allocation7 + $0x2c0] sm:$0xff]
    %v447 = vld [vmem:[#allocation7 + $0x2c8] sm:$0xff]
    %v448 = vld [vmem:[#allocation7 + $0x2d0] sm:$0xff]
    %v449 = vld [vmem:[#allocation7 + $0x2d8] sm:$0xff]
    %v450 = vld [vmem:[#allocation7 + $0x2e0] sm:$0xff]
    %v451 = vld [vmem:[#allocation7 + $0x2e8] sm:$0xff]
    %v452 = vld [vmem:[#allocation7 + $0x2f0] sm:$0xff]
    %v453 = vld [vmem:[#allocation7 + $0x2f8] sm:$0xff]
    %v454 = vld [vmem:[#allocation7 + $0x300] sm:$0xff]
    %v455 = vld [vmem:[#allocation7 + $0x308] sm:$0xff]
    %v456 = vld [vmem:[#allocation7 + $0x310] sm:$0xff]
    %v457 = vld [vmem:[#allocation7 + $0x318] sm:$0xff]
    %v458 = vld [vmem:[#allocation7 + $0x320] sm:$0xff]
    %v459 = vld [vmem:[#allocation7 + $0x328] sm:$0xff]
    %v460 = vld [vmem:[#allocation7 + $0x330] sm:$0xff]
    %v461 = vld [vmem:[#allocation7 + $0x338] sm:$0xff]
    %v462 = vld [vmem:[#allocation7 + $0x340] sm:$0xff]
    %v463 = vld [vmem:[#allocation7 + $0x348] sm:$0xff]
    %v464 = vld [vmem:[#allocation7 + $0x350] sm:$0xff]
    %v465 = vld [vmem:[#allocation7 + $0x358] sm:$0xff]
    %v466 = vld [vmem:[#allocation7 + $0x360] sm:$0xff]
    %v467 = vld [vmem:[#allocation7 + $0x368] sm:$0xff]
    %v468 = vld [vmem:[#allocation7 + $0x370] sm:$0xff]
    %v469 = vld [vmem:[#allocation7 + $0x378] sm:$0xff]
    %v470 = vld [vmem:[#allocation7 + $0x380] sm:$0xff]
    %v471 = vld [vmem:[#allocation7 + $0x388] sm:$0xff]
    %v472 = vld [vmem:[#allocation7 + $0x390] sm:$0xff]
    %v473 = vld [vmem:[#allocation7 + $0x398] sm:$0xff]
    %v474 = vld [vmem:[#allocation7 + $0x3a0] sm:$0xff]
    %v475 = vld [vmem:[#allocation7 + $0x3a8] sm:$0xff]
    %v476 = vld [vmem:[#allocation7 + $0x3b0] sm:$0xff]
    %v477 = vld [vmem:[#allocation7 + $0x3b8] sm:$0xff]
    %v478 = vld [vmem:[#allocation7 + $0x3c0] sm:$0xff]
    %v479 = vld [vmem:[#allocation7 + $0x3c8] sm:$0xff]
    %v480 = vld [vmem:[#allocation7 + $0x3d0] sm:$0xff]
    %v481 = vld [vmem:[#allocation7 + $0x3d8] sm:$0xff]
    %v482 = vld [vmem:[#allocation7 + $0x3e0] sm:$0xff]
    %v483 = vld [vmem:[#allocation7 + $0x3e8] sm:$0xff]
    %v484 = vld [vmem:[#allocation7 + $0x3f0] sm:$0xff]
    %v485 = vld [vmem:[#allocation7 + $0x3f8] sm:$0xff]
    %v486 = vld [vmem:[#allocation7 + $0x400] sm:$0xff]
    %v487 = vld [vmem:[#allocation7 + $0x408] sm:$0xff]
    %v488 = vld [vmem:[#allocation7 + $0x410] sm:$0xff]
    %v489 = vld [vmem:[#allocation7 + $0x418] sm:$0xff]
    %v490 = vld [vmem:[#allocation7 + $0x420] sm:$0xff]
    %v491 = vld [vmem:[#allocation7 + $0x428] sm:$0xff]
    %v492 = vld [vmem:[#allocation7 + $0x430] sm:$0xff]
    %v493 = vld [vmem:[#allocation7 + $0x438] sm:$0xff]
    %v494 = vld [vmem:[#allocation7 + $0x440] sm:$0xff]
    %v495 = vld [vmem:[#allocation7 + $0x448] sm:$0xff]
    %v496 = vld [vmem:[#allocation7 + $0x450] sm:$0xff]
    %v497 = vld [vmem:[#allocation7 + $0x458] sm:$0xff]
    %v498 = vld [vmem:[#allocation7 + $0x460] sm:$0xff]
    %v499 = vld [vmem:[#allocation7 + $0x468] sm:$0xff]
    %v500 = vld [vmem:[#allocation7 + $0x470] sm:$0xff]
    %v501 = vld [vmem:[#allocation7 + $0x478] sm:$0xff]
    %v502 = vld [vmem:[#allocation7 + $0x480] sm:$0xff]
    %v503 = vld [vmem:[#allocation7 + $0x488] sm:$0xff]
    %v504 = vld [vmem:[#allocation7 + $0x490] sm:$0xff]
    %v505 = vld [vmem:[#allocation7 + $0x498] sm:$0xff]
    %v506 = vld [vmem:[#allocation7 + $0x4a0] sm:$0xff]
    %v507 = vld [vmem:[#allocation7 + $0x4a8] sm:$0xff]
    %v508 = vld [vmem:[#allocation7 + $0x4b0] sm:$0xff]
    %v509 = vld [vmem:[#allocation7 + $0x4b8] sm:$0xff]
    %v510 = vld [vmem:[#allocation7 + $0x4c0] sm:$0xff]
    %v511 = vld [vmem:[#allocation7 + $0x4c8] sm:$0xff]
    %v512 = vld [vmem:[#allocation7 + $0x4d0] sm:$0xff]
    %v513 = vld [vmem:[#allocation7 + $0x4d8] sm:$0xff]
    %v514 = vld [vmem:[#allocation7 + $0x4e0] sm:$0xff]
    %v515 = vld [vmem:[#allocation7 + $0x4e8] sm:$0xff]
    %v516 = vld [vmem:[#allocation7 + $0x4f0] sm:$0xff]
    %v517 = vld [vmem:[#allocation7 + $0x4f8] sm:$0xff]
    %v518 = vld [vmem:[#allocation7 + $0x500] sm:$0xff]
    %v519 = vld [vmem:[#allocation7 + $0x508] sm:$0xff]
    %v520 = vld [vmem:[#allocation7 + $0x510] sm:$0xff]
    %v521 = vld [vmem:[#allocation7 + $0x518] sm:$0xff]
    %v522 = vld [vmem:[#allocation7 + $0x520] sm:$0xff]
    %v523 = vld [vmem:[#allocation7 + $0x528] sm:$0xff]
    %v524 = vld [vmem:[#allocation7 + $0x530] sm:$0xff]
    %v525 = vld [vmem:[#allocation7 + $0x538] sm:$0xff]
    %v526 = vld [vmem:[#allocation7 + $0x540] sm:$0xff]
    %v527 = vld [vmem:[#allocation7 + $0x548] sm:$0xff]
    %v528 = vld [vmem:[#allocation7 + $0x550] sm:$0xff]
    %v529 = vld [vmem:[#allocation7 + $0x558] sm:$0xff]
    %v530 = vld [vmem:[#allocation7 + $0x560] sm:$0xff]
    %v531 = vld [vmem:[#allocation7 + $0x568] sm:$0xff]
    %v532 = vld [vmem:[#allocation7 + $0x570] sm:$0xff]
    %v533 = vld [vmem:[#allocation7 + $0x578] sm:$0xff]
    %v534 = vld [vmem:[#allocation7 + $0x580] sm:$0xff]
    %v535 = vld [vmem:[#allocation7 + $0x588] sm:$0xff]
    %v536 = vld [vmem:[#allocation7 + $0x590] sm:$0xff]
    %v537 = vld [vmem:[#allocation7 + $0x598] sm:$0xff]
    %v538 = vld [vmem:[#allocation7 + $0x5a0] sm:$0xff]
    %v539 = vld [vmem:[#allocation7 + $0x5a8] sm:$0xff]
    %v540 = vld [vmem:[#allocation7 + $0x5b0] sm:$0xff]
    %v541 = vld [vmem:[#allocation7 + $0x5b8] sm:$0xff]
    %v542 = vld [vmem:[#allocation7 + $0x5c0] sm:$0xff]
    %v543 = vld [vmem:[#allocation7 + $0x5c8] sm:$0xff]
    %v544 = vld [vmem:[#allocation7 + $0x5d0] sm:$0xff]
    %v545 = vld [vmem:[#allocation7 + $0x5d8] sm:$0xff]
    %v546 = vld [vmem:[#allocation7 + $0x5e0] sm:$0xff]
    %v547 = vld [vmem:[#allocation7 + $0x5e8] sm:$0xff]
    %v548 = vld [vmem:[#allocation7 + $0x5f0] sm:$0xff]
    %v549 = vld [vmem:[#allocation7 + $0x5f8] sm:$0xff]
    %v550 = vld [vmem:[#allocation7 + $0x600] sm:$0xff]
    %v551 = vld [vmem:[#allocation7 + $0x608] sm:$0xff]
    %v552 = vld [vmem:[#allocation7 + $0x610] sm:$0xff]
    %v553 = vld [vmem:[#allocation7 + $0x618] sm:$0xff]
    %v554 = vld [vmem:[#allocation7 + $0x620] sm:$0xff]
    %v555 = vld [vmem:[#allocation7 + $0x628] sm:$0xff]
    %v556 = vld [vmem:[#allocation7 + $0x630] sm:$0xff]
    %v557 = vld [vmem:[#allocation7 + $0x638] sm:$0xff]
    %v558 = vld [vmem:[#allocation7 + $0x640] sm:$0xff]
    %v559 = vld [vmem:[#allocation7 + $0x648] sm:$0xff]
    %v560 = vld [vmem:[#allocation7 + $0x650] sm:$0xff]
    %v561 = vld [vmem:[#allocation7 + $0x658] sm:$0xff]
    %v562 = vld [vmem:[#allocation7 + $0x660] sm:$0xff]
    %v563 = vld [vmem:[#allocation7 + $0x668] sm:$0xff]
    %v564 = vld [vmem:[#allocation7 + $0x670] sm:$0xff]
    %v565 = vld [vmem:[#allocation7 + $0x678] sm:$0xff]
    %v566 = vld [vmem:[#allocation7 + $0x680] sm:$0xff]
    %v567 = vld [vmem:[#allocation7 + $0x688] sm:$0xff]
    %v568 = vld [vmem:[#allocation7 + $0x690] sm:$0xff]
    %v569 = vld [vmem:[#allocation7 + $0x698] sm:$0xff]
    %v570 = vld [vmem:[#allocation7 + $0x6a0] sm:$0xff]
    %v571 = vld [vmem:[#allocation7 + $0x6a8] sm:$0xff]
    %v572 = vld [vmem:[#allocation7 + $0x6b0] sm:$0xff]
    %v573 = vld [vmem:[#allocation7 + $0x6b8] sm:$0xff]
    %v574 = vld [vmem:[#allocation7 + $0x6c0] sm:$0xff]
    %v575 = vld [vmem:[#allocation7 + $0x6c8] sm:$0xff]
    %v576 = vld [vmem:[#allocation7 + $0x6d0] sm:$0xff]
    %v577 = vld [vmem:[#allocation7 + $0x6d8] sm:$0xff]
    %v578 = vld [vmem:[#allocation7 + $0x6e0] sm:$0xff]
    %v579 = vld [vmem:[#allocation7 + $0x6e8] sm:$0xff]
    %v580 = vld [vmem:[#allocation7 + $0x6f0] sm:$0xff]
    %v581 = vld [vmem:[#allocation7 + $0x6f8] sm:$0xff]
    %v582 = vld [vmem:[#allocation7 + $0x700] sm:$0xff]
    %v583 = vld [vmem:[#allocation7 + $0x708] sm:$0xff]
    %v584 = vld [vmem:[#allocation7 + $0x710] sm:$0xff]
    %v585 = vld [vmem:[#allocation7 + $0x718] sm:$0xff]
    %v586 = vld [vmem:[#allocation7 + $0x720] sm:$0xff]
    %v587 = vld [vmem:[#allocation7 + $0x728] sm:$0xff]
    %v588 = vld [vmem:[#allocation7 + $0x730] sm:$0xff]
    %v589 = vld [vmem:[#allocation7 + $0x738] sm:$0xff]
    %v590 = vld [vmem:[#allocation7 + $0x740] sm:$0xff]
    %v591 = vld [vmem:[#allocation7 + $0x748] sm:$0xff]
    %v592 = vld [vmem:[#allocation7 + $0x750] sm:$0xff]
    %v593 = vld [vmem:[#allocation7 + $0x758] sm:$0xff]
    %v594 = vld [vmem:[#allocation7 + $0x760] sm:$0xff]
    %v595 = vld [vmem:[#allocation7 + $0x768] sm:$0xff]
    %v596 = vld [vmem:[#allocation7 + $0x770] sm:$0xff]
    %v597 = vld [vmem:[#allocation7 + $0x778] sm:$0xff]
    %v598 = vld [vmem:[#allocation7 + $0x780] sm:$0xff]
    %v599 = vld [vmem:[#allocation7 + $0x788] sm:$0xff]
    %v600 = vld [vmem:[#allocation7 + $0x790] sm:$0xff]
    %v601 = vld [vmem:[#allocation7 + $0x798] sm:$0xff]
    %v602 = vld [vmem:[#allocation7 + $0x7a0] sm:$0xff]
    %v603 = vld [vmem:[#allocation7 + $0x7a8] sm:$0xff]
    %v604 = vld [vmem:[#allocation7 + $0x7b0] sm:$0xff]
    %v605 = vld [vmem:[#allocation7 + $0x7b8] sm:$0xff]
    %v606 = vld [vmem:[#allocation7 + $0x7c0] sm:$0xff]
    %v607 = vld [vmem:[#allocation7 + $0x7c8] sm:$0xff]
    %v608 = vld [vmem:[#allocation7 + $0x7d0] sm:$0xff]
    %v609 = vld [vmem:[#allocation7 + $0x7d8] sm:$0xff]
    %v610 = vld [vmem:[#allocation7 + $0x7e0] sm:$0xff]
    %v611 = vld [vmem:[#allocation7 + $0x7e8] sm:$0xff]
    %v612 = vld [vmem:[#allocation7 + $0x7f0] sm:$0xff]
    %v613 = vld [vmem:[#allocation7 + $0x7f8] sm:$0xff]
    %v614 = vld [vmem:[%s4] sm:$0xf]
    %v616 = vlaneseq
    %v617 = vshrl.u32 %v616, 7
    %v618 = vsub.s32 0, %v617
    %v619 = vrot.slane %v614, %v618
    %v620 = vlaneseq
    %v621 = vshrl.u32 %v620, 7
    %v622 = vsub.s32 1, %v621
    %v623 = vrot.slane %v614, %v622
    %v624 = vlaneseq
    %v625 = vshrl.u32 %v624, 7
    %v626 = vsub.s32 2, %v625
    %v627 = vrot.slane %v614, %v626
    %v628 = vlaneseq
    %v629 = vshrl.u32 %v628, 7
    %v630 = vsub.s32 3, %v629
    %v631 = vrot.slane %v614, %v630
    %636 = vmatprep.subr.mxu0 %v359
    %637 = vmatpush1.msra.mxu0 %v358
    %638 = vmatprep.subr.mxu0 %v363
    %639 = vmatpush1.msra.mxu0 %v362
    %640 = vmatprep.subr.mxu0 %v367
    %641 = vmatpush1.msra.mxu0 %v366
    %642 = vmatprep.subr.mxu0 %v371
    %643 = vmatpush1.msra.mxu0 %v370
    %644 = vmatprep.subr.mxu0 %v375
    %645 = vmatpush1.msra.mxu0 %v374
    %646 = vmatprep.subr.mxu0 %v379
    %647 = vmatpush1.msra.mxu0 %v378
    %648 = vmatprep.subr.mxu0 %v383
    %649 = vmatpush1.msra.mxu0 %v382
    %650 = vmatprep.subr.mxu0 %v387
    %651 = vmatpush1.msra.mxu0 %v386
    %652 = vmatprep.subr.mxu0 %v391
    %653 = vmatpush1.msra.mxu0 %v390
    %654 = vmatprep.subr.mxu0 %v395
    %655 = vmatpush1.msra.mxu0 %v394
    %656 = vmatprep.subr.mxu0 %v399
    %657 = vmatpush1.msra.mxu0 %v398
    %658 = vmatprep.subr.mxu0 %v403
    %659 = vmatpush1.msra.mxu0 %v402
    %660 = vmatprep.subr.mxu0 %v407
    %661 = vmatpush1.msra.mxu0 %v406
    %662 = vmatprep.subr.mxu0 %v411
    %663 = vmatpush1.msra.mxu0 %v410
    %664 = vmatprep.subr.mxu0 %v415
    %665 = vmatpush1.msra.mxu0 %v414
    %666 = vmatprep.subr.mxu0 %v419
    %667 = vmatpush1.msra.mxu0 %v418
    %668 = vmatprep.subr.mxu0 %v423
    %669 = vmatpush1.msra.mxu0 %v422
    %670 = vmatprep.subr.mxu0 %v427
    %671 = vmatpush1.msra.mxu0 %v426
    %672 = vmatprep.subr.mxu0 %v431
    %673 = vmatpush1.msra.mxu0 %v430
    %674 = vmatprep.subr.mxu0 %v435
    %675 = vmatpush1.msra.mxu0 %v434
    %676 = vmatprep.subr.mxu0 %v439
    %677 = vmatpush1.msra.mxu0 %v438
    %678 = vmatprep.subr.mxu0 %v443
    %679 = vmatpush1.msra.mxu0 %v442
    %680 = vmatprep.subr.mxu0 %v447
    %681 = vmatpush1.msra.mxu0 %v446
    %682 = vmatprep.subr.mxu0 %v451
    %683 = vmatpush1.msra.mxu0 %v450
    %684 = vmatprep.subr.mxu0 %v455
    %685 = vmatpush1.msra.mxu0 %v454
    %686 = vmatprep.subr.mxu0 %v459
    %687 = vmatpush1.msra.mxu0 %v458
    %688 = vmatprep.subr.mxu0 %v463
    %689 = vmatpush1.msra.mxu0 %v462
    %690 = vmatprep.subr.mxu0 %v467
    %691 = vmatpush1.msra.mxu0 %v466
    %692 = vmatprep.subr.mxu0 %v471
    %693 = vmatpush1.msra.mxu0 %v470
    %694 = vmatprep.subr.mxu0 %v475
    %695 = vmatpush1.msra.mxu0 %v474
    %696 = vmatprep.subr.mxu0 %v479
    %697 = vmatpush1.msra.mxu0 %v478
    %698 = vmatprep.subr.mxu0 %v483
    %699 = vmatpush1.msra.mxu0 %v482
    %700 = vmatprep.mubr.f32.mxu0 %v355
    %701 = vmatmul.mubr.f32.gmra.mrb[0].mxu0 %v354
    %v702 = vpop.f32.mrb[0].mxu0
    %v703 = vadd.f32 %v619, %v702
    %v704 = vpop.f32.mrb[0].mxu0
    %v705 = vadd.f32 %v623, %v704
    %706 = vdwg.mxu0
    %707 = vmatprep.subr.mxu0 %v487
    %708 = vmatpush1.msra.mxu0 %v486
    %709 = vmatprep.subr.mxu0 %v491
    %710 = vmatpush1.msra.mxu0 %v490
    %711 = vmatprep.subr.mxu0 %v495
    %712 = vmatpush1.msra.mxu0 %v494
    %713 = vmatprep.subr.mxu0 %v499
    %714 = vmatpush1.msra.mxu0 %v498
    %715 = vmatprep.subr.mxu0 %v503
    %716 = vmatpush1.msra.mxu0 %v502
    %717 = vmatprep.subr.mxu0 %v507
    %718 = vmatpush1.msra.mxu0 %v506
    %719 = vmatprep.subr.mxu0 %v511
    %720 = vmatpush1.msra.mxu0 %v510
    %721 = vmatprep.subr.mxu0 %v515
    %722 = vmatpush1.msra.mxu0 %v514
    %723 = vmatprep.subr.mxu0 %v519
    %724 = vmatpush1.msra.mxu0 %v518
    %725 = vmatprep.subr.mxu0 %v523
    %726 = vmatpush1.msra.mxu0 %v522
    %727 = vmatprep.subr.mxu0 %v527
    %728 = vmatpush1.msra.mxu0 %v526
    %729 = vmatprep.subr.mxu0 %v531
    %730 = vmatpush1.msra.mxu0 %v530
    %731 = vmatprep.subr.mxu0 %v535
    %732 = vmatpush1.msra.mxu0 %v534
    %733 = vmatprep.subr.mxu0 %v539
    %734 = vmatpush1.msra.mxu0 %v538
    %735 = vmatprep.subr.mxu0 %v543
    %736 = vmatpush1.msra.mxu0 %v542
    %737 = vmatprep.subr.mxu0 %v547
    %738 = vmatpush1.msra.mxu0 %v546
    %739 = vmatprep.subr.mxu0 %v551
    %740 = vmatpush1.msra.mxu0 %v550
    %741 = vmatprep.subr.mxu0 %v555
    %742 = vmatpush1.msra.mxu0 %v554
    %743 = vmatprep.subr.mxu0 %v559
    %744 = vmatpush1.msra.mxu0 %v558
    %745 = vmatprep.subr.mxu0 %v563
    %746 = vmatpush1.msra.mxu0 %v562
    %747 = vmatprep.subr.mxu0 %v567
    %748 = vmatpush1.msra.mxu0 %v566
    %749 = vmatprep.subr.mxu0 %v571
    %750 = vmatpush1.msra.mxu0 %v570
    %751 = vmatprep.subr.mxu0 %v575
    %752 = vmatpush1.msra.mxu0 %v574
    %753 = vmatprep.subr.mxu0 %v579
    %754 = vmatpush1.msra.mxu0 %v578
    %755 = vmatprep.subr.mxu0 %v583
    %756 = vmatpush1.msra.mxu0 %v582
    %757 = vmatprep.subr.mxu0 %v587
    %758 = vmatpush1.msra.mxu0 %v586
    %759 = vmatprep.subr.mxu0 %v591
    %760 = vmatpush1.msra.mxu0 %v590
    %761 = vmatprep.subr.mxu0 %v595
    %762 = vmatpush1.msra.mxu0 %v594
    %763 = vmatprep.subr.mxu0 %v599
    %764 = vmatpush1.msra.mxu0 %v598
    %765 = vmatprep.subr.mxu0 %v603
    %766 = vmatpush1.msra.mxu0 %v602
    %767 = vmatprep.subr.mxu0 %v607
    %768 = vmatpush1.msra.mxu0 %v606
    %769 = vmatprep.subr.mxu0 %v611
    %770 = vmatpush1.msra.mxu0 %v610
    %771 = vmatprep.mubr.f32.mxu0 %v357
    %772 = vmatmul.mubr.f32.gmra.mrb[0].mxu0 %v356
    %v773 = vpop.f32.mrb[0].mxu0
    %v774 = vadd.f32 %v703, %v773
    %v775 = vpop.f32.mrb[0].mxu0
    %v776 = vadd.f32 %v705, %v775
    %777 = vdwg.mxu0
    %778 = vmatprep.subr.mxu0 %v361
    %779 = vmatpush1.msra.mxu0 %v360
    %780 = vmatprep.subr.mxu0 %v365
    %781 = vmatpush1.msra.mxu0 %v364
    %782 = vmatprep.subr.mxu0 %v369
    %783 = vmatpush1.msra.mxu0 %v368
    %784 = vmatprep.subr.mxu0 %v373
    %785 = vmatpush1.msra.mxu0 %v372
    %786 = vmatprep.subr.mxu0 %v377
    %787 = vmatpush1.msra.mxu0 %v376
    %788 = vmatprep.subr.mxu0 %v381
    %789 = vmatpush1.msra.mxu0 %v380
    %790 = vmatprep.subr.mxu0 %v385
    %791 = vmatpush1.msra.mxu0 %v384
    %792 = vmatprep.subr.mxu0 %v389
    %793 = vmatpush1.msra.mxu0 %v388
    %794 = vmatprep.subr.mxu0 %v393
    %795 = vmatpush1.msra.mxu0 %v392
    %796 = vmatprep.subr.mxu0 %v397
    %797 = vmatpush1.msra.mxu0 %v396
    %798 = vmatprep.subr.mxu0 %v401
    %799 = vmatpush1.msra.mxu0 %v400
    %800 = vmatprep.subr.mxu0 %v405
    %801 = vmatpush1.msra.mxu0 %v404
    %802 = vmatprep.subr.mxu0 %v409
    %803 = vmatpush1.msra.mxu0 %v408
    %804 = vmatprep.subr.mxu0 %v413
    %805 = vmatpush1.msra.mxu0 %v412
    %806 = vmatprep.subr.mxu0 %v417
    %807 = vmatpush1.msra.mxu0 %v416
    %808 = vmatprep.subr.mxu0 %v421
    %809 = vmatpush1.msra.mxu0 %v420
    %810 = vmatprep.subr.mxu0 %v425
    %811 = vmatpush1.msra.mxu0 %v424
    %812 = vmatprep.subr.mxu0 %v429
    %813 = vmatpush1.msra.mxu0 %v428
    %814 = vmatprep.subr.mxu0 %v433
    %815 = vmatpush1.msra.mxu0 %v432
    %816 = vmatprep.subr.mxu0 %v437
    %817 = vmatpush1.msra.mxu0 %v436
    %818 = vmatprep.subr.mxu0 %v441
    %819 = vmatpush1.msra.mxu0 %v440
    %820 = vmatprep.subr.mxu0 %v445
    %821 = vmatpush1.msra.mxu0 %v444
    %822 = vmatprep.subr.mxu0 %v449
    %823 = vmatpush1.msra.mxu0 %v448
    %824 = vmatprep.subr.mxu0 %v453
    %825 = vmatpush1.msra.mxu0 %v452
    %826 = vmatprep.subr.mxu0 %v457
    %827 = vmatpush1.msra.mxu0 %v456
    %828 = vmatprep.subr.mxu0 %v461
    %829 = vmatpush1.msra.mxu0 %v460
    %830 = vmatprep.subr.mxu0 %v465
    %831 = vmatpush1.msra.mxu0 %v464
    %832 = vmatprep.subr.mxu0 %v469
    %833 = vmatpush1.msra.mxu0 %v468
    %834 = vmatprep.subr.mxu0 %v473
    %835 = vmatpush1.msra.mxu0 %v472
    %836 = vmatprep.subr.mxu0 %v477
    %837 = vmatpush1.msra.mxu0 %v476
    %838 = vmatprep.subr.mxu0 %v481
    %839 = vmatpush1.msra.mxu0 %v480
    %840 = vmatprep.subr.mxu0 %v485
    %841 = vmatpush1.msra.mxu0 %v484
    %842 = vmatprep.mubr.f32.mxu0 %v355
    %843 = vmatmul.mubr.f32.gmra.mrb[0].mxu0 %v354
    %v844 = vpop.f32.mrb[0].mxu0
    %v845 = vadd.f32 %v627, %v844
    %v846 = vpop.f32.mrb[0].mxu0
    %v847 = vadd.f32 %v631, %v846
    %848 = vdwg.mxu0
    %849 = vmatprep.subr.mxu0 %v489
    %850 = vmatpush1.msra.mxu0 %v488
    %851 = vmatprep.subr.mxu0 %v493
    %852 = vmatpush1.msra.mxu0 %v492
    %853 = vmatprep.subr.mxu0 %v497
    %854 = vmatpush1.msra.mxu0 %v496
    %855 = vmatprep.subr.mxu0 %v501
    %856 = vmatpush1.msra.mxu0 %v500
    %857 = vmatprep.subr.mxu0 %v505
    %858 = vmatpush1.msra.mxu0 %v504
    %859 = vmatprep.subr.mxu0 %v509
    %860 = vmatpush1.msra.mxu0 %v508
    %861 = vmatprep.subr.mxu0 %v513
    %862 = vmatpush1.msra.mxu0 %v512
    %863 = vmatprep.subr.mxu0 %v517
    %864 = vmatpush1.msra.mxu0 %v516
    %865 = vmatprep.subr.mxu0 %v521
    %866 = vmatpush1.msra.mxu0 %v520
    %867 = vmatprep.subr.mxu0 %v525
    %868 = vmatpush1.msra.mxu0 %v524
    %869 = vmatprep.subr.mxu0 %v529
    %870 = vmatpush1.msra.mxu0 %v528
    %871 = vmatprep.subr.mxu0 %v533
    %872 = vmatpush1.msra.mxu0 %v532
    %873 = vmatprep.subr.mxu0 %v537
    %874 = vmatpush1.msra.mxu0 %v536
    %875 = vmatprep.subr.mxu0 %v541
    %876 = vmatpush1.msra.mxu0 %v540
    %877 = vmatprep.subr.mxu0 %v545
    %878 = vmatpush1.msra.mxu0 %v544
    %879 = vmatprep.subr.mxu0 %v549
    %880 = vmatpush1.msra.mxu0 %v548
    %881 = vmatprep.subr.mxu0 %v553
    %882 = vmatpush1.msra.mxu0 %v552
    %883 = vmatprep.subr.mxu0 %v557
    %884 = vmatpush1.msra.mxu0 %v556
    %885 = vmatprep.subr.mxu0 %v561
    %886 = vmatpush1.msra.mxu0 %v560
    %887 = vmatprep.subr.mxu0 %v565
    %888 = vmatpush1.msra.mxu0 %v564
    %889 = vmatprep.subr.mxu0 %v569
    %890 = vmatpush1.msra.mxu0 %v568
    %891 = vmatprep.subr.mxu0 %v573
    %892 = vmatpush1.msra.mxu0 %v572
    %893 = vmatprep.subr.mxu0 %v577
    %894 = vmatpush1.msra.mxu0 %v576
    %895 = vmatprep.subr.mxu0 %v581
    %896 = vmatpush1.msra.mxu0 %v580
    %897 = vmatprep.subr.mxu0 %v585
    %898 = vmatpush1.msra.mxu0 %v584
    %899 = vmatprep.subr.mxu0 %v589
    %900 = vmatpush1.msra.mxu0 %v588
    %901 = vmatprep.subr.mxu0 %v593
    %902 = vmatpush1.msra.mxu0 %v592
    %903 = vmatprep.subr.mxu0 %v597
    %904 = vmatpush1.msra.mxu0 %v596
    %905 = vmatprep.subr.mxu0 %v601
    %906 = vmatpush1.msra.mxu0 %v600
    %907 = vmatprep.subr.mxu0 %v605
    %908 = vmatpush1.msra.mxu0 %v604
    %909 = vmatprep.subr.mxu0 %v609
    %910 = vmatpush1.msra.mxu0 %v608
    %911 = vmatprep.subr.mxu0 %v613
    %912 = vmatpush1.msra.mxu0 %v612
    %913 = vmatprep.mubr.f32.mxu0 %v357
    %914 = vmatmul.mubr.f32.gmra.mrb[0].mxu0 %v356
    %v915 = vpop.f32.mrb[0].mxu0
    %v916 = vadd.f32 %v845, %v915
    %v917 = vpop.f32.mrb[0].mxu0
    %v918 = vadd.f32 %v847, %v917
    %919 = vdwg.mxu0
    %v920 = vmax.f32 %v774, 0.0
    %v921 = vmax.f32 %v776, 0.0
    %v922 = vmax.f32 %v916, 0.0
    %v923 = vmax.f32 %v918, 0.0
    %924 = vst [vmem:[#allocation8] sm:$0xff] %v920
    %925 = vst [vmem:[#allocation8 + $0x8] sm:$0xff] %v921
    %926 = vst [vmem:[#allocation8 + $0x10] sm:$0xff] %v922
    %927 = vst [vmem:[#allocation8 + $0x18] sm:$0xff] %v923
    // Predicated region
    $region34: #{tpu_custom_call.1} parent=1 // pred_check
      _
    $region35: #{tpu_custom_call.1} parent=1 // pred_check_branch
      %929 = sbr.rel (0) target = $region37
    $region36: #{tpu_custom_call.1} parent=1 // pred_region
      %s931 = ssub.s32 512, 512
      %932 = vsyncadd [#allocation4], %s931
      %s934 = sshll.u32 [#allocation8], 4
      %s935 = int_to_ptr.vmem [resolvable:$true] %s934
      %937 = dma.vmem_to_hbm [thread:$0]  %s935, 512, %s5, [#allocation4]
    $region37: #{tpu_custom_call.1} parent=1 // pred_fallthru
      _
    // Predicated region
    $region38: #{tpu_custom_call.1} parent=1 // pred_check
      _
    $region39: #{tpu_custom_call.1} parent=1 // pred_check_branch
      %939 = sbr.rel (0) target = $region41
    $region40: #{tpu_custom_call.1} parent=1 // pred_region
      %940 = dma.done [#allocation4], 512
    $region41: #{tpu_custom_call.1} parent=1 // pred_fallthru
      _
    %941 = vsyncpa [#allocation3], 1
    %942 = vsyncpa [#allocation6], 1
    %943 = vsyncpa [#allocation4], 1

</llo_original>
